<compile_context>
chip_gen: v5e
topology: v5e:2x2
jax: 0.10.0
libtpu: 0.0.40
codegen_flags: <defaults>
</compile_context>

<pallas_src>
import functools
import math

import jax
import jax.numpy as jnp
from jax.experimental import pallas as pl
from jax.experimental.pallas import tpu as pltpu

F32 = jnp.float32
BF16 = jnp.bfloat16

_PARALLEL_B = pltpu.CompilerParams(dimension_semantics=("parallel",))


# index maps --------------------------------------------------------------
def _batch3(b):          # per-batch-element activation blocks
    return (b, 0, 0)


def _batch4(b):
    return (b, 0, 0, 0)


def _resident2(b):       # weights / biases / LN params stay VMEM-resident
    return (0, 0)


# ---------------------------------------------------------------------------
# In-kernel building blocks (pure functions on loaded tiles, all f32 math
# except the bf16 MXU operands)
# ---------------------------------------------------------------------------
def _mha_block(x, kv, mask, wq, bq, wk, bk, wv, bv, wo, bo, n_heads, head_dim):
    """x: (Lq,H) f32 query/residual; kv: (Lk,H) f32; mask broadcastable to
    (n_heads, Lq, Lk).  Returns (o (Lq,H) f32, attn (h,Lq,Lk) f32)."""
    xb = x.astype(BF16)
    kvb = kv.astype(BF16)

    # Full-width projections (H x H MXU matmuls), f32 accumulation.
    q = jnp.dot(xb, wq, preferred_element_type=F32) + bq
    k = jnp.dot(kvb, wk, preferred_element_type=F32) + bk
    v = jnp.dot(kvb, wv, preferred_element_type=F32) + bv

    # Fold 1/sqrt(head_dim) into Q (removes a (h,Lq,Lk) elementwise divide).
    q = q * jnp.float32(1.0 / math.sqrt(head_dim))

    # Split heads onto a leading batch axis (static lane slices + leading-dim
    # stack — avoids lane-splitting reshapes inside the kernel).
    def split_heads(t):
        return jnp.stack(
            [t[:, h * head_dim:(h + 1) * head_dim] for h in range(n_heads)],
            axis=0)

    qh = split_heads(q).astype(BF16)   # (h, Lq, d)
    kh = split_heads(k).astype(BF16)   # (h, Lk, d)
    vh = split_heads(v).astype(BF16)   # (h, Lk, d)

    # Batched scores + masked softmax (f32) + batched context.
    scores = jnp.einsum('hqd,hkd->hqk', qh, kh, preferred_element_type=F32)
    scores = jnp.where(mask == jnp.float32(0.0), jnp.float32(-1e10), scores)
    m = jnp.max(scores, axis=-1, keepdims=True)
    p = jnp.exp(scores - m)
    denom = jnp.sum(p, axis=-1, keepdims=True)
    attn = p * pl.reciprocal(denom, approx=True)            # (h, Lq, Lk) f32

    ctx = jnp.einsum('hqk,hkd->hqd', attn.astype(BF16), vh,
                     preferred_element_type=F32)             # (h, Lq, d) f32

    # Merge heads back to (Lq, H) and apply the output projection.
    ctx_cat = jnp.concatenate([ctx[h] for h in range(n_heads)], axis=-1)
    o = jnp.dot(ctx_cat.astype(BF16), wo, preferred_element_type=F32) + bo
    return o, attn


def _add_ln(x, y, gamma, beta):
    """Residual add + LayerNorm (eps = 1e-5, PyTorch default), f32 math."""
    s = x + y
    mean = jnp.mean(s, axis=-1, keepdims=True)
    var = jnp.mean((s - mean) ** 2, axis=-1, keepdims=True)
    return (s - mean) * jax.lax.rsqrt(var + jnp.float32(1e-5)) * gamma + beta


# ---------------------------------------------------------------------------
# Embedding scale + positional add (elementwise, runs once per forward)
# ---------------------------------------------------------------------------
def _embed_scale_kernel(scale, tok_ref, pos_ref, out_ref):
    out_ref[0] = tok_ref[0] * jnp.float32(scale) + pos_ref[...]


def embed_scale(tok_emb, pos_emb_t, scale):
    B, T, H = tok_emb.shape
    return pl.pallas_call(
        functools.partial(_embed_scale_kernel, scale),
        grid=(B,),
        out_shape=jax.ShapeDtypeStruct((B, T, H), F32),
        in_specs=[pl.BlockSpec((1, T, H), _batch3),
                  pl.BlockSpec((T, H), _resident2)],
        out_specs=pl.BlockSpec((1, T, H), _batch3),
        compiler_params=_PARALLEL_B,
    )(tok_emb, pos_emb_t)


# ---------------------------------------------------------------------------
# Fused decoder layer: self-attn + add&LN, enc-attn + add&LN, FFN + add&LN
# ---------------------------------------------------------------------------
def _decoder_layer_kernel(n_heads, head_dim,
                          x_ref, enc_ref, tmask_ref, smask_ref,
                          # self-attention + LN1
                          swq, sbq, swk, sbk, swv, sbv, swo, sbo, ln1g, ln1b,
                          # encoder-attention + LN2
                          ewq, ebq, ewk, ebk, ewv, ebv, ewo, ebo, ln2g, ln2b,
                          # feed-forward + LN3
                          w1, fb1, w2, fb2, ln3g, ln3b,
                          out_ref, attn_ref=None):
    x = x_ref[0]            # (T, H) f32
    enc = enc_ref[0]        # (S, H) f32
    tmask = tmask_ref[0]    # (T, T) f32
    smask = smask_ref[0]    # (1, S) f32

    # 1) self-attention + residual + LayerNorm (attention not materialized)
    o, _ = _mha_block(x, x, tmask,
                      swq[...], sbq[...], swk[...], sbk[...],
                      swv[...], sbv[...], swo[...], sbo[...],
                      n_heads, head_dim)
    x = _add_ln(x, o, ln1g[...], ln1b[...])

    # 2) encoder-attention + residual + LayerNorm
    o, attn = _mha_block(x, enc, smask,
                         ewq[...], ebq[...], ewk[...], ebk[...],
                         ewv[...], ebv[...], ewo[...], ebo[...],
                         n_heads, head_dim)
    x = _add_ln(x, o, ln2g[...], ln2b[...])

    # 3) position-wise FFN + residual + LayerNorm
    h = jnp.dot(x.astype(BF16), w1[...], preferred_element_type=F32) + fb1[...]
    h = jnp.maximum(h, jnp.float32(0.0))
    o = jnp.dot(h.astype(BF16), w2[...], preferred_element_type=F32) + fb2[...]
    x = _add_ln(x, o, ln3g[...], ln3b[...])

    out_ref[0] = x
    # Only emitted for the final layer (the module's returned attention).
    if attn_ref is not None:
        attn_ref[0] = attn


def decoder_layer_forward(x, enc_src, trg_m, src_m, lp, n_heads,
                          return_attn=False):
    B, T, H = x.shape
    S = enc_src.shape[1]
    P = lp['ffn']['w1'].shape[1]
    head_dim = H // n_heads
    sa, ea, ff = lp['self_attn'], lp['enc_attn'], lp['ffn']

    wspec = lambda shape: pl.BlockSpec(shape, _resident2)

    in_specs = [
        pl.BlockSpec((1, T, H), _batch3),       # x (residual / query)
        pl.BlockSpec((1, S, H), _batch3),       # enc_src
        pl.BlockSpec((1, T, T), _batch3),       # compact self-attn mask
        pl.BlockSpec((1, 1, S), _batch3),       # compact enc-attn pad mask
    ]
    # self-attn weights + LN1
    in_specs += [wspec((H, H)), wspec((1, H))] * 4 + [wspec((1, H))] * 2
    # enc-attn weights + LN2
    in_specs += [wspec((H, H)), wspec((1, H))] * 4 + [wspec((1, H))] * 2
    # FFN weights + LN3
    in_specs += [wspec((H, P)), wspec((1, P)), wspec((P, H)), wspec((1, H)),
                 wspec((1, H)), wspec((1, H))]

    args = [x, enc_src, trg_m, src_m,
            sa['wq'], sa['bq'], sa['wk'], sa['bk'], sa['wv'], sa['bv'],
            sa['wo'], sa['bo'], lp['ln1_g'], lp['ln1_b'],
            ea['wq'], ea['bq'], ea['wk'], ea['bk'], ea['wv'], ea['bv'],
            ea['wo'], ea['bo'], lp['ln2_g'], lp['ln2_b'],
            ff['w1'], ff['b1'], ff['w2'], ff['b2'], lp['ln3_g'], lp['ln3_b']]

    kernel = functools.partial(_decoder_layer_kernel, n_heads, head_dim)

    if return_attn:
        out_shape = (jax.ShapeDtypeStruct((B, T, H), F32),
                     jax.ShapeDtypeStruct((B, n_heads, T, S), F32))
        out_specs = (pl.BlockSpec((1, T, H), _batch3),
                     pl.BlockSpec((1, n_heads, T, S), _batch4))
    else:
        out_shape = jax.ShapeDtypeStruct((B, T, H), F32)
        out_specs = pl.BlockSpec((1, T, H), _batch3)

    return pl.pallas_call(
        kernel,
        grid=(B,),
        out_shape=out_shape,
        in_specs=in_specs,
        out_specs=out_specs,
        compiler_params=_PARALLEL_B,
    )(*args)


# ---------------------------------------------------------------------------
# Final projection fc_out, tiled over the vocab dimension
# ---------------------------------------------------------------------------
def _linear_kernel(x_ref, w_ref, b_ref, out_ref):
    out_ref[0] = jnp.dot(x_ref[0].astype(BF16), w_ref[...],
                         preferred_element_type=F32) + b_ref[...]


def linear_forward(x, w, b, max_tile_o=2048):
    B, T, H = x.shape
    O = w.shape[1]

    # Lane-dense vocab tiling: largest 128-multiple divisor of O that fits the
    # budget; fall back to the full dim when O is small / not 128-aligned.
    tile_o = O
    if O % 128 == 0 and O > max_tile_o:
        for t in range(max_tile_o, 127, -128):
            if O % t == 0:
                tile_o = t
                break

    # Grid ordered (vocab_tile, batch): the large (H, tile_o) weight block is
    # reused across the inner batch steps; only the small x block re-DMAs.
    return pl.pallas_call(
        _linear_kernel,
        grid=(O // tile_o, B),
        out_shape=jax.ShapeDtypeStruct((B, T, O), F32),
        in_specs=[pl.BlockSpec((1, T, H), lambda o, bi: (bi, 0, 0)),
                  pl.BlockSpec((H, tile_o), lambda o, bi: (0, o)),
                  pl.BlockSpec((1, tile_o), lambda o, bi: (0, o))],
        out_specs=pl.BlockSpec((1, T, tile_o), lambda o, bi: (bi, 0, o)),
        compiler_params=pltpu.CompilerParams(
            dimension_semantics=("parallel", "parallel")),
    )(x, w, b)


# ---------------------------------------------------------------------------
# Full Decoder forward
# ---------------------------------------------------------------------------
def decoder_forward(trg_tokens, enc_src, trg_mask, src_mask, params, n_heads):
    B, T = trg_tokens.shape
    H = params['tok_emb'].shape[1]

    # Embedding gathers (JAX glue); scale + positional add runs in Pallas.
    tok = jnp.take(params['tok_emb'], trg_tokens, axis=0)      # (B,T,H)
    x = embed_scale(tok, params['pos_emb'][:T], math.sqrt(H))
    # TODO(synk): dropout omitted (identity at inference).

    # Compact masks: (B, T, T) causal+pad for self-attn, (B, 1, S) for enc-attn.
    trg_m = trg_mask[:, 0].astype(F32)
    src_m = src_mask[:, 0].astype(F32)

    n_layers = len(params['layers'])
    attention = None
    for li, lp in enumerate(params['layers']):
        want_attn = (li == n_layers - 1)
        res = decoder_layer_forward(x, enc_src, trg_m, src_m, lp, n_heads,
                                    return_attn=want_attn)
        if want_attn:
            x, attention = res
        else:
            x = res

    output = linear_forward(x, params['fc_out_w'], params['fc_out_b'])
    return output, attention


# ---------------------------------------------------------------------------
# Deterministic parameter init (weights bf16, biases / LN params / embeds f32)
# ---------------------------------------------------------------------------
def init_params(key, output_dim, hid_dim, n_layers, n_heads, pf_dim, max_length):
    def nxt():
        nonlocal key
        key, sub = jax.random.split(key)
        return sub

    def lin(din, dout):
        w = (jax.random.normal(nxt(), (din, dout), F32) * 0.02).astype(BF16)
        b = jnp.zeros((1, dout), F32)
        return w, b

    def mha_p():
        wq, bq = lin(hid_dim, hid_dim)
        wk, bk = lin(hid_dim, hid_dim)
        wv, bv = lin(hid_dim, hid_dim)
        wo, bo = lin(hid_dim, hid_dim)
        # note: the PyTorch module's fc 'v', 'W', 'U' are unused for att='gen'
        return dict(wq=wq, bq=bq, wk=wk, bk=bk, wv=wv, bv=bv, wo=wo, bo=bo)

    layers = []
    for _ in range(n_layers):
        w1, b1 = lin(hid_dim, pf_dim)
        w2, b2 = lin(pf_dim, hid_dim)
        layers.append(dict(
            self_attn=mha_p(), enc_attn=mha_p(),
            ffn=dict(w1=w1, b1=b1, w2=w2, b2=b2),
            ln1_g=jnp.ones((1, hid_dim), F32), ln1_b=jnp.zeros((1, hid_dim), F32),
            ln2_g=jnp.ones((1, hid_dim), F32), ln2_b=jnp.zeros((1, hid_dim), F32),
            ln3_g=jnp.ones((1, hid_dim), F32), ln3_b=jnp.zeros((1, hid_dim), F32),
        ))

    fc_out_w, fc_out_b = lin(hid_dim, output_dim)
    return dict(
        tok_emb=jax.random.normal(nxt(), (output_dim, hid_dim), F32) * 0.02,
        pos_emb=jax.random.normal(nxt(), (max_length, hid_dim), F32) * 0.02,
        layers=layers, fc_out_w=fc_out_w, fc_out_b=fc_out_b,
    )


if __name__ == "__main__":
    B, T, S = 2, 8, 10
    hid_dim, n_heads, pf_dim, n_layers = 32, 4, 64, 2
    output_dim, max_length = 64, 100

    key = jax.random.PRNGKey(0)
    k_tok, k_enc, k_params = jax.random.split(key, 3)

    trg_tokens = jax.random.randint(k_tok, (B, T), 0, output_dim)
    enc_src = jax.random.normal(k_enc, (B, S, hid_dim), F32)

    # trg_mask: causal (B,1,T,T); src_mask: all-ones pad mask (B,1,1,S)
    causal = jnp.tril(jnp.ones((T, T), F32))
    trg_mask = jnp.broadcast_to(causal[None, None], (B, 1, T, T))
    src_mask = jnp.ones((B, 1, 1, S), F32)

    params = init_params(k_params, output_dim, hid_dim, n_layers, n_heads,
                         pf_dim, max_length)

    output, attention = decoder_forward(trg_tokens, enc_src, trg_mask, src_mask,
                                        params, n_heads)
    jax.block_until_ready((output, attention))
    assert output.shape == (B, T, output_dim)
    assert attention.shape == (B, n_heads, T, S)
    print("KERNEL_OK")
</pallas_src>

<mosaic_0001>
module attributes {stable_mosaic.version = 11 : i64} {
  func.func @_embed_scale_kernel(%arg0: i32, %arg1: memref<1x8x32xf32, #tpu.memory_space<vmem>>, %arg2: memref<8x32xf32, #tpu.memory_space<vmem>>, %arg3: memref<1x8x32xf32, #tpu.memory_space<vmem>>) attributes {dimension_semantics = [#tpu.dimension_semantics<parallel>], iteration_bounds = array<i64: 2>, scalar_prefetch = 0 : i64, scratch_operands = 0 : i64, tpu.core_type = #tpu.core_type<tc>, window_params = [{transform_indices = @transform_0, window_bounds = array<i64: 1, 8, 32>}, {pipeline_mode = #tpu.pipeline_mode<synchronous>, transform_indices = @transform_1, window_bounds = array<i64: 8, 32>}, {transform_indices = @transform_2, window_bounds = array<i64: 1, 8, 32>}]} {
    %c0 = arith.constant 0 : index
    %c0_0 = arith.constant 0 : index
    %c0_1 = arith.constant 0 : index
    %0 = vector.load %arg1[%c0, %c0_0, %c0_1] : memref<1x8x32xf32, #tpu.memory_space<vmem>>, vector<1x8x32xf32>
    %1 = vector.shape_cast %0 : vector<1x8x32xf32> to vector<8x32xf32>
    %cst = arith.constant 5.65685415 : f32
    %2 = vector.broadcast %cst : f32 to vector<8x32xf32>
    %3 = arith.mulf %1, %2 : vector<8x32xf32>
    %c0_2 = arith.constant 0 : index
    %c0_3 = arith.constant 0 : index
    %4 = vector.load %arg2[%c0_2, %c0_3] : memref<8x32xf32, #tpu.memory_space<vmem>>, vector<8x32xf32>
    %5 = arith.addf %3, %4 : vector<8x32xf32>
    %c0_4 = arith.constant 0 : index
    %c0_5 = arith.constant 0 : index
    %c0_6 = arith.constant 0 : index
    %6 = vector.load %arg3[%c0_4, %c0_5, %c0_6] : memref<1x8x32xf32, #tpu.memory_space<vmem>>, vector<1x8x32xf32>
    %7 = vector.shape_cast %6 : vector<1x8x32xf32> to vector<8x32xf32>
    %8 = vector.shape_cast %5 : vector<8x32xf32> to vector<1x8x32xf32>
    tpu.vector_store %arg3[%c0_4, %c0_5, %c0_6], %8 {strides = array<i32>} : memref<1x8x32xf32, #tpu.memory_space<vmem>>, vector<1x8x32xf32>,
    return
  }
  func.func @transform_0(%arg0: i32) -> (i32, i32, i32) {
    %c0_i32 = arith.constant 0 : i32
    %c0_i32_0 = arith.constant 0 : i32
    %c0_i32_1 = arith.constant 0 : i32
    return %arg0, %c0_i32, %c0_i32_0 : i32, i32, i32
  }
  func.func @transform_1(%arg0: i32) -> (i32, i32) {
    %c0_i32 = arith.constant 0 : i32
    %c0_i32_0 = arith.constant 0 : i32
    %c0_i32_1 = arith.constant 0 : i32
    return %c0_i32, %c0_i32_0 : i32, i32
  }
  func.func @transform_2(%arg0: i32) -> (i32, i32, i32) {
    %c0_i32 = arith.constant 0 : i32
    %c0_i32_0 = arith.constant 0 : i32
    %c0_i32_1 = arith.constant 0 : i32
    return %arg0, %c0_i32, %c0_i32_0 : i32, i32, i32
  }
}

</mosaic_0001>

<llo_original>
// kernel: tpu_custom_call.1
$region0: #{tpu_custom_call.1}
  #allocation0 [shape = 'u32[]', space=smem, size = 0x4, offset = 0x4, fixed_abs, tag = 'smem constant byte address 0x4 - core index']
  #allocation1 [shape = 'u32[72,128]{1,0:T(1,128)}', space=vmem, size = 0x9000, scoped, tag = 'internal scratch']
  %s0 = inlined_call_operand.hbm [shape: f32[2,8,32], index: 0, kind: input, shape index: {}]
  %s1 = inlined_call_operand.hbm [shape: f32[8,32], index: 1, kind: input, shape index: {}]
  %s2 = inlined_call_operand.hbm [shape: f32[2,8,32], index: 2, kind: output, shape index: {}]
  %s3 = sld [smem:[#allocation0]]
  $region49: #{tpu_custom_call.1} parent=0
    _
  %s5 = ssub.s32 1, %s3
  %s6 = scalar_select 0, %s5, %s3
  $region1: #{tpu_custom_call.1} parent=0
    #allocation2 [shape = 'u8[8192]{0}', space=vmem, size = 0x2000, scoped, tag = 'input window, operand 0']
    #allocation3 [shape = 's32[2]{0}', space=sflag, size = 0x8, scoped, tag = 'scoped memory for tpu_custom_call.1']
    #allocation4 [shape = 's32[2]{0}', space=sflag, size = 0x8, scoped, tag = 'scoped memory for tpu_custom_call.1']
    #allocation5 [shape = 'u8[4096]{0}', space=vmem, size = 0x1000, scoped, tag = 'input window, operand 1, single buffered']
    #allocation6 [shape = 's32[1]{0}', space=sflag, size = 0x4, scoped, tag = 'scoped memory for tpu_custom_call.1']
    #allocation7 [shape = 'u8[8192]{0}', space=vmem, size = 0x2000, scoped, tag = 'output window, operand 0']
    %7 = vsyncpa [#allocation3], 0
    %s8 = scalar_lea.sflag [#allocation3], 1
    %9 = vsyncpa %s8, 0
    %10 = vsyncpa [#allocation6], 0
    %11 = vsyncpa [#allocation4], 0
    %s12 = scalar_lea.sflag [#allocation4], 1
    %13 = vsyncpa %s12, 0
    loop: start=0, step=1, limit=4
    $region2: #{tpu_custom_call.1} parent=1 // loop_pre_header
      _
    $region3: #{tpu_custom_call.1} parent=1 // loop_header
      %s15 = sphi 0, %s19
      %p16 = scmp.ge.s32.totalorder %s15, 4
      %s25 = sphi 0, %s27
      %s28 = sphi 0, %s25
      %s29 = sphi 0, %s28
      %s45 = sphi 0, %s29
      %s49 = sphi 0, %s49
      %s51 = sphi 0, %s49
      %s52 = sphi 0, %s51
      %s66 = sphi 0, %s52
      %s72 = sphi 0, %s74
      %s75 = sphi 0, %s72
      %s76 = sphi 0, %s75
      %s92 = sphi 0, %s76
    $region4: #{tpu_custom_call.1} parent=1 // loop_header_branch
      %18 = sbr.rel (%p16) target = $region8
    $region5: #{tpu_custom_call.1} parent=1 // loop_body
      %s20 = ssub.s32 %s15, 1
      %s21 = ssub.s32 %s15, 2
      %s22 = sadd.s32 %s15, 1
      %s23 = ssub.s32 %s15, %s22
      %p24 = scmp.eq.s32.totalorder %s23, 0
      %s26 = sadd.s32 %s25, 1
      %s27 = scalar_select %p24, %s25, %s26
      %p30 = pneg %p24
      %p31 = scmp.eq.s32.totalorder %s15, 1
      %p32 = por %p30, %p31
      %p33 = scmp.ne.s32.totalorder %s25, %s28
      %p34 = scmp.eq.s32.totalorder %s15, 0
      %p35 = por %p33, %p34
      %p36 = scmp.ne.s32.totalorder %s25, %s28
      %p37 = scmp.eq.s32.totalorder %s20, 1
      %p38 = por %p36, %p37
      %p39 = scmp.ne.s32.totalorder %s28, %s29
      %p40 = scmp.eq.s32.totalorder %s20, 0
      %p41 = por %p39, %p40
      %p42 = scmp.ne.s32.totalorder %s28, %s29
      %p43 = scmp.eq.s32.totalorder %s21, 1
      %p44 = por %p42, %p43
      %p46 = scmp.ne.s32.totalorder %s29, %s45
      %p47 = scmp.eq.s32.totalorder %s21, 0
      %p48 = por %p46, %p47
      %s50 = sadd.s32 %s49, 1
      %p53 = scmp.eq.s32.totalorder %s15, 1
      %p54 = scmp.ne.s32.totalorder %s49, %s51
      %p55 = scmp.eq.s32.totalorder %s15, 0
      %p56 = por %p54, %p55
      %p57 = scmp.ne.s32.totalorder %s49, %s51
      %p58 = scmp.eq.s32.totalorder %s20, 1
      %p59 = por %p57, %p58
      %p60 = scmp.ne.s32.totalorder %s51, %s52
      %p61 = scmp.eq.s32.totalorder %s20, 0
      %p62 = por %p60, %p61
      %p63 = scmp.ne.s32.totalorder %s51, %s52
      %p64 = scmp.eq.s32.totalorder %s21, 1
      %p65 = por %p63, %p64
      %p67 = scmp.ne.s32.totalorder %s52, %s66
      %p68 = scmp.eq.s32.totalorder %s21, 0
      %p69 = por %p67, %p68
      %s70 = ssub.s32 %s15, %s22
      %p71 = scmp.eq.s32.totalorder %s70, 0
      %s73 = sadd.s32 %s72, 1
      %s74 = scalar_select %p71, %s72, %s73
      %p77 = pneg %p71
      %p78 = scmp.eq.s32.totalorder %s15, 1
      %p79 = por %p77, %p78
      %p80 = scmp.ne.s32.totalorder %s72, %s75
      %p81 = scmp.eq.s32.totalorder %s15, 0
      %p82 = por %p80, %p81
      %p83 = scmp.ne.s32.totalorder %s72, %s75
      %p84 = scmp.eq.s32.totalorder %s20, 1
      %p85 = por %p83, %p84
      %p86 = scmp.ne.s32.totalorder %s75, %s76
      %p87 = scmp.eq.s32.totalorder %s20, 0
      %p88 = por %p86, %p87
      %p89 = scmp.ne.s32.totalorder %s75, %s76
      %p90 = scmp.eq.s32.totalorder %s21, 1
      %p91 = por %p89, %p90
      %p93 = scmp.ne.s32.totalorder %s76, %s92
      %p94 = scmp.eq.s32.totalorder %s21, 0
      %p95 = por %p93, %p94
      %p96 = scmp.le.s32.totalorder 1, %s15
      %p97 = scmp.lt.s32.totalorder %s15, 3
      %p98 = pnand %p96, %p97
      %p99 = pneg %p98
      // Predicated region
      $region9: #{tpu_custom_call.1} parent=5 // pred_check
        _
      $region10: #{tpu_custom_call.1} parent=5 // pred_check_branch
        %101 = sbr.rel (%p98) target = $region12
      $region11: #{tpu_custom_call.1} parent=5 // pred_region
        %s102 = ssub.s32 %s15, 1
        // Predicated region
        $region13: #{tpu_custom_call.1} parent=11 // pred_check
          %p103 = pneg %p62
        $region14: #{tpu_custom_call.1} parent=11 // pred_check_branch
          %105 = sbr.rel (%p103) target = $region16
        $region15: #{tpu_custom_call.1} parent=11 // pred_region
          %107 = vsyncadd [#allocation6], 0
          %s109 = sshll.u32 %s1, 4
          %s110 = int_to_ptr.hbm [resolvable:$true] %s109
          %s111 = sshll.u32 [#allocation5], 4
          %s112 = int_to_ptr.vmem [resolvable:$true] %s111
          %114 = dma.hbm_to_vmem [thread:$0]  %s110, 128, %s112, [#allocation6]
        $region16: #{tpu_custom_call.1} parent=11 // pred_fallthru
          _
      $region12: #{tpu_custom_call.1} parent=5 // pred_fallthru
        _
      %p115 = scmp.lt.s32.totalorder %s15, 2
      // Predicated region
      $region17: #{tpu_custom_call.1} parent=5 // pred_check
        %p116 = pneg %p115
      $region18: #{tpu_custom_call.1} parent=5 // pred_check_branch
        %118 = sbr.rel (%p116) target = $region20
      $region19: #{tpu_custom_call.1} parent=5 // pred_region
        // Predicated region
        $region21: #{tpu_custom_call.1} parent=19 // pred_check
          %p119 = pneg %p35
        $region22: #{tpu_custom_call.1} parent=19 // pred_check_branch
          %121 = sbr.rel (%p119) target = $region24
        $region23: #{tpu_custom_call.1} parent=19 // pred_region
          %s122 = sand.u32 %s25, 1
          %s123 = scalar_lea.sflag [#allocation3], %s122
          %s124 = sand.u32 %s25, 1
          %s125 = smul.addr %s124, 8
          %s126 = scalar_lea.vmem [#allocation2], %s125
          %128 = vsyncadd %s123, 0
          %s129 = smul.addr %s15, 8
          %s130 = scalar_lea.hbm %s0, %s129
          %s132 = sshll.u32 %s130, 4
          %s133 = int_to_ptr.hbm [resolvable:$true] %s132
          %s134 = sshll.u32 %s126, 4
          %s135 = int_to_ptr.vmem [resolvable:$true] %s134
          %137 = dma.hbm_to_vmem [thread:$0]  %s133, 128, %s135, %s123
        $region24: #{tpu_custom_call.1} parent=19 // pred_fallthru
          _
      $region20: #{tpu_custom_call.1} parent=5 // pred_fallthru
        _
      %p138 = scmp.le.s32.totalorder 1, %s15
      %p139 = scmp.lt.s32.totalorder %s15, 3
      %p140 = pnand %p138, %p139
      %p141 = pneg %p140
      // Predicated region
      $region25: #{tpu_custom_call.1} parent=5 // pred_check
        _
      $region26: #{tpu_custom_call.1} parent=5 // pred_check_branch
        %143 = sbr.rel (%p140) target = $region28
      $region27: #{tpu_custom_call.1} parent=5 // pred_region
        %s144 = ssub.s32 %s15, 1
        %s145 = sand.u32 %s28, 1
        %s146 = scalar_lea.sflag [#allocation3], %s145
        %s147 = sand.u32 %s28, 1
        %s148 = smul.addr %s147, 8
        %s149 = scalar_lea.vmem [#allocation2], %s148
        // Predicated region
        $region29: #{tpu_custom_call.1} parent=27 // pred_check
          %p150 = pneg %p41
        $region30: #{tpu_custom_call.1} parent=27 // pred_check_branch
          %152 = sbr.rel (%p150) target = $region32
        $region31: #{tpu_custom_call.1} parent=27 // pred_region
          %154 = dma.done %s146, 128
        $region32: #{tpu_custom_call.1} parent=27 // pred_fallthru
          _
        // Predicated region
        $region33: #{tpu_custom_call.1} parent=27 // pred_check
          %p155 = pneg %p62
        $region34: #{tpu_custom_call.1} parent=27 // pred_check_branch
          %157 = sbr.rel (%p155) target = $region36
        $region35: #{tpu_custom_call.1} parent=27 // pred_region
          %159 = dma.done [#allocation6], 128
        $region36: #{tpu_custom_call.1} parent=27 // pred_fallthru
          _
        %s160 = sand.u32 %s28, 1
        %s161 = scalar_lea.sflag [#allocation3], %s160
        %s162 = sand.u32 %s28, 1
        %s163 = smul.addr %s162, 8
        %s164 = scalar_lea.vmem [#allocation2], %s163
        %p165 = pneg %p41
        %p166 = pneg %p38
        %p167 = pneg %p62
        %p168 = pneg %p59
        %p169 = pneg %p88
        %p170 = pneg %p85
        %s171 = sand.u32 %s75, 1
        %s172 = scalar_lea.sflag [#allocation4], %s171
        %s173 = sand.u32 %s75, 1
        %s174 = smul.addr %s173, 8
        %s175 = scalar_lea.vmem [#allocation7], %s174
        %v176 = vld [vmem:[%s149] sm:$0xff]
        %v177 = vmul.f32 %v176, 5.656854
        %v178 = vld [vmem:[#allocation5] sm:$0xff]
        %v179 = vadd.f32 %v177, %v178
        %vm180 = vcmask 261120
        %181 = vst.msk [vmem:[%s175] sm:$0xff] %vm180, %v179
        %s182 = sand.u32 %s75, 1
        %s183 = scalar_lea.sflag [#allocation4], %s182
        %s184 = sand.u32 %s75, 1
        %s185 = smul.addr %s184, 8
        %s186 = scalar_lea.vmem [#allocation7], %s185
        // Predicated region
        $region37: #{tpu_custom_call.1} parent=27 // pred_check
          %p187 = pneg %p85
        $region38: #{tpu_custom_call.1} parent=27 // pred_check_branch
          %189 = sbr.rel (%p187) target = $region40
        $region39: #{tpu_custom_call.1} parent=27 // pred_region
          %191 = vsyncadd %s183, 0
          %s192 = smul.addr %s20, 8
          %s193 = scalar_lea.hbm %s2, %s192
          %s195 = sshll.u32 %s186, 4
          %s196 = int_to_ptr.vmem [resolvable:$true] %s195
          %s197 = sshll.u32 %s193, 4
          %s198 = int_to_ptr.hbm [resolvable:$true] %s197
          %200 = dma.vmem_to_hbm [thread:$0]  %s196, 128, %s198, %s183
        $region40: #{tpu_custom_call.1} parent=27 // pred_fallthru
          _
      $region28: #{tpu_custom_call.1} parent=5 // pred_fallthru
        _
      %p201 = scmp.le.s32.totalorder 2, %s15
      // Predicated region
      $region41: #{tpu_custom_call.1} parent=5 // pred_check
        %p202 = pneg %p201
      $region42: #{tpu_custom_call.1} parent=5 // pred_check_branch
        %204 = sbr.rel (%p202) target = $region44
      $region43: #{tpu_custom_call.1} parent=5 // pred_region
        %s205 = ssub.s32 %s15, 2
        // Predicated region
        $region45: #{tpu_custom_call.1} parent=43 // pred_check
          %p206 = pneg %p91
        $region46: #{tpu_custom_call.1} parent=43 // pred_check_branch
          %208 = sbr.rel (%p206) target = $region48
        $region47: #{tpu_custom_call.1} parent=43 // pred_region
          %s209 = sand.u32 %s76, 1
          %s210 = scalar_lea.sflag [#allocation4], %s209
          %s211 = sand.u32 %s76, 1
          %s212 = smul.addr %s211, 8
          %s213 = scalar_lea.vmem [#allocation7], %s212
          %215 = dma.done %s210, 128
        $region48: #{tpu_custom_call.1} parent=43 // pred_fallthru
          _
      $region44: #{tpu_custom_call.1} parent=5 // pred_fallthru
        _
    $region6: #{tpu_custom_call.1} parent=1 // loop_footer
      %s19 = sadd.s32 1, %s15
    $region7: #{tpu_custom_call.1} parent=1 // loop_footer_branch
      %14 = sbr.rel target = $region3
    $region8: #{tpu_custom_call.1} parent=1 // loop_exit
      _
    %216 = vsyncpa [#allocation3], 1
    %s217 = scalar_lea.sflag [#allocation3], 1
    %218 = vsyncpa %s217, 1
    %219 = vsyncpa [#allocation6], 1
    %220 = vsyncpa [#allocation4], 1
    %s221 = scalar_lea.sflag [#allocation4], 1
    %222 = vsyncpa %s221, 1

</llo_original>
